<compile_context>
chip_gen: v5e
topology: v5e:2x2
jax: 0.10.0
libtpu: 0.0.40
codegen_flags: <defaults>
</compile_context>

<pallas_src>
import math

import jax
import jax.numpy as jnp
from jax.experimental import pallas as pl
from jax.experimental.pallas import tpu as pltpu


def _make_pe_table(d_model: int, max_len: int) -> jnp.ndarray:
    """Deterministic sin/cos positional-encoding table, shape (max_len, d_model)."""
    position = jnp.arange(max_len, dtype=jnp.float32)[:, None]            # (max_len, 1)
    div_term = jnp.exp(
        jnp.arange(0, d_model, 2, dtype=jnp.float32) * (-math.log(10000.0) / d_model)
    )                                                                      # (d_model//2,)
    angles = position * div_term                                           # (max_len, d_model//2)
    pe = jnp.zeros((max_len, d_model), dtype=jnp.float32)
    pe = pe.at[:, 0::2].set(jnp.sin(angles))
    pe = pe.at[:, 1::2].set(jnp.cos(angles))
    return pe


def _pe_add_kernel(x_ref, pe_ref, o_ref):
    # x_ref, pe_ref, o_ref: (TILE_S, batch*d_model) VMEM tiles, same dtype/layout.
    # Pure streaming VPU add; all the work is the HBM<->VMEM DMA around it.
    o_ref[...] = (x_ref[...] + pe_ref[...]).astype(o_ref.dtype)


def _choose_tile_rows(seq_len: int, row_bytes: int, target_bytes: int = 2 << 20) -> int:
    """Pick a seq-tile height: ~2 MiB per x tile, multiple of 8 sublanes.

    With x, pe and out each double-buffered this keeps live VMEM around
    ~12 MiB, comfortably under the default scoped limit on v5e/v6e/v7x.
    """
    rows = max(1, target_bytes // max(row_bytes, 1))
    rows = max(8, (rows // 8) * 8)          # sublane-aligned
    if rows >= seq_len:
        return seq_len                      # full extent is always a legal block dim
    return int(rows)


def positional_encoding_forward(x: jnp.ndarray, pe_table: jnp.ndarray) -> jnp.ndarray:
    """x: [seq_len, batch, d_model]; pe_table: [max_len, d_model] (float32)."""
    seq_len, batch, d_model = x.shape
    assert pe_table.shape[0] >= seq_len and pe_table.shape[1] == d_model

    w = batch * d_model
    itemsize = jnp.dtype(x.dtype).itemsize

    # Free view: x is contiguous, so folding batch into the lane axis is a no-op reshape.
    x2 = x.reshape(seq_len, w)
    # Broadcast pe over batch once (column k = b*d_model + d -> pe[s, d]) and
    # match x's dtype so the kernel add needs no promote/downcast.
    pe2 = jnp.tile(pe_table[:seq_len].astype(x.dtype), (1, batch))

    tile_s = _choose_tile_rows(seq_len, w * itemsize)
    grid = (pl.cdiv(seq_len, tile_s),)

    n = seq_len * w
    cost = pl.CostEstimate(
        flops=n,
        transcendentals=0,
        bytes_accessed=3 * n * itemsize,    # read x, read broadcast pe, write out
    )

    out2 = pl.pallas_call(
        _pe_add_kernel,
        out_shape=jax.ShapeDtypeStruct((seq_len, w), x.dtype),
        grid=grid,
        in_specs=[
            pl.BlockSpec((tile_s, w), lambda i: (i, 0)),
            pl.BlockSpec((tile_s, w), lambda i: (i, 0)),
        ],
        out_specs=pl.BlockSpec((tile_s, w), lambda i: (i, 0)),
        compiler_params=pltpu.CompilerParams(
            # Independent seq tiles: lets v7x shard across both TensorCores;
            # harmless no-op on single-TC v5e/v6e.
            dimension_semantics=("parallel",),
        ),
        cost_estimate=cost,
    )(x2, pe2)

    return out2.reshape(seq_len, batch, d_model)


if __name__ == "__main__":
    # Small shapes consistent with the module's forward: [seq_len, batch, d_model]
    seq_len, batch, d_model = 8, 2, 32
    max_len = 64  # small deterministic table (module default is 5000)

    key = jax.random.PRNGKey(0)
    x = jax.random.normal(key, (seq_len, batch, d_model), dtype=jnp.float32)

    pe_table = _make_pe_table(d_model, max_len)

    out = positional_encoding_forward(x, pe_table)
    out = jax.block_until_ready(out)

    # Pure-JAX reference check (same semantics as the PyTorch forward)
    ref = x + pe_table[:seq_len][:, None, :]
    assert out.shape == (seq_len, batch, d_model)
    assert jnp.allclose(out, ref, atol=1e-6), "mismatch vs reference"

    print("KERNEL_OK")
</pallas_src>

<mosaic_0001>
module attributes {stable_mosaic.version = 11 : i64} {
  func.func @_pe_add_kernel(%arg0: i32, %arg1: memref<8x64xf32, #tpu.memory_space<vmem>>, %arg2: memref<8x64xf32, #tpu.memory_space<vmem>>, %arg3: memref<8x64xf32, #tpu.memory_space<vmem>>) attributes {dimension_semantics = [#tpu.dimension_semantics<parallel>], iteration_bounds = array<i64: 1>, scalar_prefetch = 0 : i64, scratch_operands = 0 : i64, tpu.core_type = #tpu.core_type<tc>, window_params = [{transform_indices = @transform_0, window_bounds = array<i64: 8, 64>}, {transform_indices = @transform_1, window_bounds = array<i64: 8, 64>}, {transform_indices = @transform_2, window_bounds = array<i64: 8, 64>}]} {
    %c0 = arith.constant 0 : index
    %c0_0 = arith.constant 0 : index
    %0 = vector.load %arg1[%c0, %c0_0] : memref<8x64xf32, #tpu.memory_space<vmem>>, vector<8x64xf32>
    %c0_1 = arith.constant 0 : index
    %c0_2 = arith.constant 0 : index
    %1 = vector.load %arg2[%c0_1, %c0_2] : memref<8x64xf32, #tpu.memory_space<vmem>>, vector<8x64xf32>
    %2 = arith.addf %0, %1 : vector<8x64xf32>
    %c0_3 = arith.constant 0 : index
    %c0_4 = arith.constant 0 : index
    %3 = vector.load %arg3[%c0_3, %c0_4] : memref<8x64xf32, #tpu.memory_space<vmem>>, vector<8x64xf32>
    tpu.vector_store %arg3[%c0_3, %c0_4], %2 {strides = array<i32>} : memref<8x64xf32, #tpu.memory_space<vmem>>, vector<8x64xf32>,
    return
  }
  func.func @transform_0(%arg0: i32) -> (i32, i32) {
    %c0_i32 = arith.constant 0 : i32
    %c0_i32_0 = arith.constant 0 : i32
    return %arg0, %c0_i32 : i32, i32
  }
  func.func @transform_1(%arg0: i32) -> (i32, i32) {
    %c0_i32 = arith.constant 0 : i32
    %c0_i32_0 = arith.constant 0 : i32
    return %arg0, %c0_i32 : i32, i32
  }
  func.func @transform_2(%arg0: i32) -> (i32, i32) {
    %c0_i32 = arith.constant 0 : i32
    %c0_i32_0 = arith.constant 0 : i32
    return %arg0, %c0_i32 : i32, i32
  }
}

</mosaic_0001>

<llo_original>
// kernel: tpu_custom_call.1
$region0: #{tpu_custom_call.1}
  #allocation0 [shape = 'u32[]', space=smem, size = 0x4, offset = 0x4, fixed_abs, tag = 'smem constant byte address 0x4 - core index']
  #allocation1 [shape = 'u32[72,128]{1,0:T(1,128)}', space=vmem, size = 0x9000, scoped, tag = 'internal scratch']
  %s0 = inlined_call_operand.hbm [shape: f32[8,64], index: 0, kind: input, shape index: {}]
  %s1 = inlined_call_operand.hbm [shape: f32[8,64], index: 1, kind: input, shape index: {}]
  %s2 = inlined_call_operand.hbm [shape: f32[8,64], index: 2, kind: output, shape index: {}]
  %s3 = sld [smem:[#allocation0]]
  $region26: #{tpu_custom_call.1} parent=0
    _
  %s5 = ssub.s32 1, %s3
  %s6 = scalar_select 0, %s5, %s3
  $region1: #{tpu_custom_call.1} parent=0
    #allocation2 [shape = 'u8[4096]{0}', space=vmem, size = 0x1000, scoped, tag = 'input window, operand 0, single buffered']
    #allocation3 [shape = 's32[1]{0}', space=sflag, size = 0x4, scoped, tag = 'scoped memory for tpu_custom_call.1']
    #allocation4 [shape = 's32[1]{0}', space=sflag, size = 0x4, scoped, tag = 'scoped memory for tpu_custom_call.1']
    #allocation5 [shape = 'u8[4096]{0}', space=vmem, size = 0x1000, scoped, tag = 'input window, operand 1, single buffered']
    #allocation6 [shape = 's32[1]{0}', space=sflag, size = 0x4, scoped, tag = 'scoped memory for tpu_custom_call.1']
    #allocation7 [shape = 'u8[4096]{0}', space=vmem, size = 0x1000, scoped, tag = 'output window, operand 0, single buffered']
    %7 = vsyncpa [#allocation3], 0
    %8 = vsyncpa [#allocation6], 0
    %9 = vsyncpa [#allocation4], 0
    // Predicated region
    $region2: #{tpu_custom_call.1} parent=1 // pred_check
      _
    $region3: #{tpu_custom_call.1} parent=1 // pred_check_branch
      %11 = sbr.rel (0) target = $region5
    $region4: #{tpu_custom_call.1} parent=1 // pred_region
      %13 = vsyncadd [#allocation3], 0
      %s15 = sshll.u32 %s0, 4
      %s16 = int_to_ptr.hbm [resolvable:$true] %s15
      %s17 = sshll.u32 [#allocation2], 4
      %s18 = int_to_ptr.vmem [resolvable:$true] %s17
      %20 = dma.hbm_to_vmem [thread:$0]  %s16, 128, %s18, [#allocation3]
    $region5: #{tpu_custom_call.1} parent=1 // pred_fallthru
      _
    // Predicated region
    $region6: #{tpu_custom_call.1} parent=1 // pred_check
      _
    $region7: #{tpu_custom_call.1} parent=1 // pred_check_branch
      %22 = sbr.rel (0) target = $region9
    $region8: #{tpu_custom_call.1} parent=1 // pred_region
      %24 = vsyncadd [#allocation6], 0
      %s26 = sshll.u32 %s1, 4
      %s27 = int_to_ptr.hbm [resolvable:$true] %s26
      %s28 = sshll.u32 [#allocation5], 4
      %s29 = int_to_ptr.vmem [resolvable:$true] %s28
      %31 = dma.hbm_to_vmem [thread:$0]  %s27, 128, %s29, [#allocation6]
    $region9: #{tpu_custom_call.1} parent=1 // pred_fallthru
      _
    // Predicated region
    $region10: #{tpu_custom_call.1} parent=1 // pred_check
      _
    $region11: #{tpu_custom_call.1} parent=1 // pred_check_branch
      %33 = sbr.rel (0) target = $region13
    $region12: #{tpu_custom_call.1} parent=1 // pred_region
      %35 = dma.done [#allocation3], 128
    $region13: #{tpu_custom_call.1} parent=1 // pred_fallthru
      _
    // Predicated region
    $region14: #{tpu_custom_call.1} parent=1 // pred_check
      _
    $region15: #{tpu_custom_call.1} parent=1 // pred_check_branch
      %37 = sbr.rel (0) target = $region17
    $region16: #{tpu_custom_call.1} parent=1 // pred_region
      %39 = dma.done [#allocation6], 128
    $region17: #{tpu_custom_call.1} parent=1 // pred_fallthru
      _
    %v40 = vld [vmem:[#allocation2] sm:$0xff]
    %v41 = vld [vmem:[#allocation5] sm:$0xff]
    %v42 = vadd.f32 %v40, %v41
    %vm43 = vcmask 523264
    %44 = vst.msk [vmem:[#allocation7] sm:$0xff] %vm43, %v42
    // Predicated region
    $region18: #{tpu_custom_call.1} parent=1 // pred_check
      _
    $region19: #{tpu_custom_call.1} parent=1 // pred_check_branch
      %46 = sbr.rel (0) target = $region21
    $region20: #{tpu_custom_call.1} parent=1 // pred_region
      %48 = vsyncadd [#allocation4], 0
      %s50 = sshll.u32 [#allocation7], 4
      %s51 = int_to_ptr.vmem [resolvable:$true] %s50
      %s52 = sshll.u32 %s2, 4
      %s53 = int_to_ptr.hbm [resolvable:$true] %s52
      %55 = dma.vmem_to_hbm [thread:$0]  %s51, 128, %s53, [#allocation4]
    $region21: #{tpu_custom_call.1} parent=1 // pred_fallthru
      _
    // Predicated region
    $region22: #{tpu_custom_call.1} parent=1 // pred_check
      _
    $region23: #{tpu_custom_call.1} parent=1 // pred_check_branch
      %57 = sbr.rel (0) target = $region25
    $region24: #{tpu_custom_call.1} parent=1 // pred_region
      %59 = dma.done [#allocation4], 128
    $region25: #{tpu_custom_call.1} parent=1 // pred_fallthru
      _
    %60 = vsyncpa [#allocation3], 1
    %61 = vsyncpa [#allocation6], 1
    %62 = vsyncpa [#allocation4], 1

</llo_original>
